<compile_context>
chip_gen: v7x
topology: tpu7x:2x2x1
jax: 0.10.0
libtpu: 0.0.40
codegen_flags: <defaults>
</compile_context>

<pallas_src>
import functools

import jax
import jax.numpy as jnp
from jax.experimental import pallas as pl
from jax.experimental.pallas import tpu as pltpu


def _round_up(n, m):
    return ((n + m - 1) // m) * m


def _mlp_kernel(x_ref, w1_ref, b1_ref, w2_ref, b2_ref, w3_ref, b3_ref, o_ref):
    # One (tb, in_feats) row-tile per grid step; weights stay VMEM-resident.
    x = x_ref[...]  # bf16 on the fast path; MXU accumulates in f32.

    # Layer 1: MXU dot (f32 accumulation), f32 bias + ReLU epilogue.
    h1 = jnp.dot(x, w1_ref[...], preferred_element_type=jnp.float32) + b1_ref[...]
    h1 = jnp.maximum(h1, 0.0)

    # Layer 2: feed the MXU in the weights' dtype (identity cast in f32 mode).
    h2 = jnp.dot(h1.astype(w2_ref.dtype), w2_ref[...],
                 preferred_element_type=jnp.float32) + b2_ref[...]
    h2 = jnp.maximum(h2, 0.0)

    # Output layer: narrow (out_dim-wide) store straight to the unpadded block.
    y = jnp.dot(h2.astype(w3_ref.dtype), w3_ref[...],
                preferred_element_type=jnp.float32) + b3_ref[...]
    o_ref[...] = y.astype(o_ref.dtype)


@functools.partial(jax.jit, static_argnames=("block_b", "use_bf16"))
def simple_nn_regressor_forward(x, params, *, block_b=8192, use_bf16=True):
    """x: (B, inputs, 2) float32. params: dict of pre-transposed weights/biases."""
    B = x.shape[0]
    x2d = x.reshape(B, -1)                 # matches input.view(B, -1)
    in_feats = x2d.shape[1]

    w1, b1 = params["w1"], params["b1"]    # (in, 64), (1, 64)
    w2, b2 = params["w2"], params["b2"]    # (64, 32), (1, 32)
    w3, b3 = params["w3"], params["b3"]    # (32, out), (1, out)
    out_dim = w3.shape[1]

    if use_bf16:
        # Halves the dominant x HBM stream; MXU still accumulates in f32 and
        # the bias/ReLU epilogue stays f32 (v5e's VPU has no bf16).
        x2d = x2d.astype(jnp.bfloat16)
        w1 = w1.astype(jnp.bfloat16)
        w2 = w2.astype(jnp.bfloat16)
        w3 = w3.astype(jnp.bfloat16)
        # biases stay f32 (epilogue dtype)
    # TODO(synk): int8 weight quantization deliberately not used (v7x MXU is fp8-only).

    # Batch tile: multiple of 8 (f32/bf16 sublane rule via divisibility-by-8),
    # large enough to amortize per-step overhead, capped so there are >= 2
    # grid steps whenever B allows it (v7x megacore sharding of the batch axis).
    tb = min(block_b, _round_up(pl.cdiv(B, 2), 8))
    tb = _round_up(max(tb, 8), 8)
    grid = (pl.cdiv(B, tb),)   # no jnp.pad: Pallas masks the partial last block

    # Weights/biases: constant block index -> VMEM-resident across grid steps.
    const_spec = lambda arr: pl.BlockSpec(arr.shape, lambda i: (0, 0))

    out = pl.pallas_call(
        _mlp_kernel,
        out_shape=jax.ShapeDtypeStruct((B, out_dim), jnp.float32),
        grid=grid,
        in_specs=[
            pl.BlockSpec((tb, in_feats), lambda i: (i, 0)),   # x row tiles
            const_spec(w1), const_spec(b1),
            const_spec(w2), const_spec(b2),
            const_spec(w3), const_spec(b3),
        ],
        out_specs=pl.BlockSpec((tb, out_dim), lambda i: (i, 0)),
        compiler_params=pltpu.CompilerParams(
            dimension_semantics=("parallel",)),               # v7x megacore
    )(x2d, w1, b1, w2, b2, w3, b3)

    return out


def init_params(inputs, outputs, l1=64, l2=32, seed=0):
    """Deterministic PyTorch-style (uniform(-1/sqrt(fan_in), 1/sqrt(fan_in))) init."""
    key = jax.random.PRNGKey(seed)
    dims = [(inputs * 2, l1), (l1, l2), (l2, outputs)]
    params = {}
    for idx, (fan_in, fan_out) in enumerate(dims, start=1):
        key, kw, kb = jax.random.split(key, 3)
        bound = 1.0 / jnp.sqrt(jnp.float32(fan_in))
        params[f"w{idx}"] = jax.random.uniform(
            kw, (fan_in, fan_out), jnp.float32, -bound, bound)
        params[f"b{idx}"] = jax.random.uniform(
            kb, (1, fan_out), jnp.float32, -bound, bound)
    return params


def reference_forward(x, params):
    """Pure-JAX reference for correctness checking."""
    h = x.reshape(x.shape[0], -1)
    h = jax.nn.relu(h @ params["w1"] + params["b1"])
    h = jax.nn.relu(h @ params["w2"] + params["b2"])
    return h @ params["w3"] + params["b3"]


if __name__ == "__main__":
    inputs, outputs = 8, 4
    params = init_params(inputs, outputs)
    key = jax.random.PRNGKey(0)

    # 1) Small case matching the module spec: x (2, 8, 2) -> flattened (2, 16).
    B = 2
    key, k1 = jax.random.split(key)
    x = jax.random.normal(k1, (B, inputs, 2), dtype=jnp.float32)
    y_ref = reference_forward(x, params)

    # Default bf16 fast path: looser tolerance (bf16 inputs, f32 accumulate).
    y_bf16 = jax.block_until_ready(simple_nn_regressor_forward(x, params))
    assert y_bf16.shape == (B, outputs)
    assert jnp.allclose(y_bf16, y_ref, atol=5e-2, rtol=5e-2)

    # Full-f32 path: exact-ish match against the reference.
    y_f32 = jax.block_until_ready(
        simple_nn_regressor_forward(x, params, use_bf16=False))
    assert jnp.allclose(y_f32, y_ref, atol=1e-5, rtol=1e-5)

    # 2) Ragged-batch case to exercise the batch grid + masked partial block:
    #    B=300 with block_b=128 -> grid=(3,), last block covers only 44 rows.
    B2 = 300
    key, k2 = jax.random.split(key)
    x2 = jax.random.normal(k2, (B2, inputs, 2), dtype=jnp.float32)
    y2_ref = reference_forward(x2, params)
    y2 = jax.block_until_ready(
        simple_nn_regressor_forward(x2, params, block_b=128, use_bf16=False))
    assert y2.shape == (B2, outputs)
    assert jnp.allclose(y2, y2_ref, atol=1e-5, rtol=1e-5)
    y2b = jax.block_until_ready(
        simple_nn_regressor_forward(x2, params, block_b=128))
    assert jnp.allclose(y2b, y2_ref, atol=5e-2, rtol=5e-2)

    print("KERNEL_OK")
</pallas_src>

<mosaic_0001>
module attributes {stable_mosaic.version = 11 : i64} {
  func.func @_mlp_kernel(%arg0: i32, %arg1: memref<8x16xbf16, #tpu.memory_space<vmem>>, %arg2: memref<16x64xbf16, #tpu.memory_space<vmem>>, %arg3: memref<1x64xf32, #tpu.memory_space<vmem>>, %arg4: memref<64x32xbf16, #tpu.memory_space<vmem>>, %arg5: memref<1x32xf32, #tpu.memory_space<vmem>>, %arg6: memref<32x4xbf16, #tpu.memory_space<vmem>>, %arg7: memref<1x4xf32, #tpu.memory_space<vmem>>, %arg8: memref<8x4xf32, #tpu.memory_space<vmem>>) attributes {dimension_semantics = [#tpu.dimension_semantics<parallel>], iteration_bounds = array<i64: 1>, scalar_prefetch = 0 : i64, scratch_operands = 0 : i64, tpu.core_type = #tpu.core_type<tc>, window_params = [{transform_indices = @transform_0, window_bounds = array<i64: 8, 16>}, {pipeline_mode = #tpu.pipeline_mode<synchronous>, transform_indices = @transform_1, window_bounds = array<i64: 16, 64>}, {pipeline_mode = #tpu.pipeline_mode<synchronous>, transform_indices = @transform_2, window_bounds = array<i64: 1, 64>}, {pipeline_mode = #tpu.pipeline_mode<synchronous>, transform_indices = @transform_3, window_bounds = array<i64: 64, 32>}, {pipeline_mode = #tpu.pipeline_mode<synchronous>, transform_indices = @transform_4, window_bounds = array<i64: 1, 32>}, {pipeline_mode = #tpu.pipeline_mode<synchronous>, transform_indices = @transform_5, window_bounds = array<i64: 32, 4>}, {pipeline_mode = #tpu.pipeline_mode<synchronous>, transform_indices = @transform_6, window_bounds = array<i64: 1, 4>}, {transform_indices = @transform_7, window_bounds = array<i64: 8, 4>}]} {
    %c0 = arith.constant 0 : index
    %c0_0 = arith.constant 0 : index
    %0 = vector.load %arg1[%c0, %c0_0] : memref<8x16xbf16, #tpu.memory_space<vmem>>, vector<8x16xbf16>
    %c0_1 = arith.constant 0 : index
    %c0_2 = arith.constant 0 : index
    %1 = vector.load %arg2[%c0_1, %c0_2] : memref<16x64xbf16, #tpu.memory_space<vmem>>, vector<16x64xbf16>
    %cst = arith.constant dense<0.000000e+00> : vector<8x64xf32>
    %2 = tpu.matmul %0, %1, %cst {dimension_numbers = #tpu.dot_dimension_numbers<[1], [0], [0], [1], [0, 0, 1, 1], [], []>} : vector<8x16xbf16>, vector<16x64xbf16>, vector<8x64xf32> -> vector<8x64xf32>
    %c0_3 = arith.constant 0 : index
    %c0_4 = arith.constant 0 : index
    %3 = vector.load %arg3[%c0_3, %c0_4] : memref<1x64xf32, #tpu.memory_space<vmem>>, vector<1x64xf32>
    %4 = vector.broadcast %3 : vector<1x64xf32> to vector<8x64xf32>
    %5 = arith.addf %2, %4 : vector<8x64xf32>
    %cst_5 = arith.constant 0.000000e+00 : f32
    %6 = vector.broadcast %cst_5 : f32 to vector<8x64xf32>
    %7 = arith.maximumf %5, %6 : vector<8x64xf32>
    %8 = arith.truncf %7 : vector<8x64xf32> to vector<8x64xbf16>
    %c0_6 = arith.constant 0 : index
    %c0_7 = arith.constant 0 : index
    %9 = vector.load %arg4[%c0_6, %c0_7] : memref<64x32xbf16, #tpu.memory_space<vmem>>, vector<64x32xbf16>
    %cst_8 = arith.constant dense<0.000000e+00> : vector<8x32xf32>
    %10 = tpu.matmul %8, %9, %cst_8 {dimension_numbers = #tpu.dot_dimension_numbers<[1], [0], [0], [1], [0, 0, 1, 1], [], []>} : vector<8x64xbf16>, vector<64x32xbf16>, vector<8x32xf32> -> vector<8x32xf32>
    %c0_9 = arith.constant 0 : index
    %c0_10 = arith.constant 0 : index
    %11 = vector.load %arg5[%c0_9, %c0_10] : memref<1x32xf32, #tpu.memory_space<vmem>>, vector<1x32xf32>
    %12 = vector.broadcast %11 : vector<1x32xf32> to vector<8x32xf32>
    %13 = arith.addf %10, %12 : vector<8x32xf32>
    %cst_11 = arith.constant 0.000000e+00 : f32
    %14 = vector.broadcast %cst_11 : f32 to vector<8x32xf32>
    %15 = arith.maximumf %13, %14 : vector<8x32xf32>
    %16 = arith.truncf %15 : vector<8x32xf32> to vector<8x32xbf16>
    %c0_12 = arith.constant 0 : index
    %c0_13 = arith.constant 0 : index
    %17 = vector.load %arg6[%c0_12, %c0_13] : memref<32x4xbf16, #tpu.memory_space<vmem>>, vector<32x4xbf16>
    %cst_14 = arith.constant dense<0.000000e+00> : vector<8x4xf32>
    %18 = tpu.matmul %16, %17, %cst_14 {dimension_numbers = #tpu.dot_dimension_numbers<[1], [0], [0], [1], [0, 0, 1, 1], [], []>} : vector<8x32xbf16>, vector<32x4xbf16>, vector<8x4xf32> -> vector<8x4xf32>
    %c0_15 = arith.constant 0 : index
    %c0_16 = arith.constant 0 : index
    %19 = vector.load %arg7[%c0_15, %c0_16] : memref<1x4xf32, #tpu.memory_space<vmem>>, vector<1x4xf32>
    %20 = vector.broadcast %19 : vector<1x4xf32> to vector<8x4xf32>
    %21 = arith.addf %18, %20 : vector<8x4xf32>
    %c0_17 = arith.constant 0 : index
    %c0_18 = arith.constant 0 : index
    %22 = vector.load %arg8[%c0_17, %c0_18] : memref<8x4xf32, #tpu.memory_space<vmem>>, vector<8x4xf32>
    tpu.vector_store %arg8[%c0_17, %c0_18], %21 {strides = array<i32>} : memref<8x4xf32, #tpu.memory_space<vmem>>, vector<8x4xf32>,
    return
  }
  func.func @transform_0(%arg0: i32) -> (i32, i32) {
    %c0_i32 = arith.constant 0 : i32
    %c0_i32_0 = arith.constant 0 : i32
    return %arg0, %c0_i32 : i32, i32
  }
  func.func @transform_1(%arg0: i32) -> (i32, i32) {
    %c0_i32 = arith.constant 0 : i32
    %c0_i32_0 = arith.constant 0 : i32
    %c0_i32_1 = arith.constant 0 : i32
    return %c0_i32, %c0_i32_0 : i32, i32
  }
  func.func @transform_2(%arg0: i32) -> (i32, i32) {
    %c0_i32 = arith.constant 0 : i32
    %c0_i32_0 = arith.constant 0 : i32
    %c0_i32_1 = arith.constant 0 : i32
    return %c0_i32, %c0_i32_0 : i32, i32
  }
  func.func @transform_3(%arg0: i32) -> (i32, i32) {
    %c0_i32 = arith.constant 0 : i32
    %c0_i32_0 = arith.constant 0 : i32
    %c0_i32_1 = arith.constant 0 : i32
    return %c0_i32, %c0_i32_0 : i32, i32
  }
  func.func @transform_4(%arg0: i32) -> (i32, i32) {
    %c0_i32 = arith.constant 0 : i32
    %c0_i32_0 = arith.constant 0 : i32
    %c0_i32_1 = arith.constant 0 : i32
    return %c0_i32, %c0_i32_0 : i32, i32
  }
  func.func @transform_5(%arg0: i32) -> (i32, i32) {
    %c0_i32 = arith.constant 0 : i32
    %c0_i32_0 = arith.constant 0 : i32
    %c0_i32_1 = arith.constant 0 : i32
    return %c0_i32, %c0_i32_0 : i32, i32
  }
  func.func @transform_6(%arg0: i32) -> (i32, i32) {
    %c0_i32 = arith.constant 0 : i32
    %c0_i32_0 = arith.constant 0 : i32
    %c0_i32_1 = arith.constant 0 : i32
    return %c0_i32, %c0_i32_0 : i32, i32
  }
  func.func @transform_7(%arg0: i32) -> (i32, i32) {
    %c0_i32 = arith.constant 0 : i32
    %c0_i32_0 = arith.constant 0 : i32
    return %arg0, %c0_i32 : i32, i32
  }
}

</mosaic_0001>

<llo_original>
// kernel: simple_nn_regressor_forward.1
$region0: #{simple_nn_regressor_forward.1}
  #allocation0 [shape = 'u32[]', space=smem, size = 0x4, offset = 0x4, fixed_abs, tag = 'smem constant byte address 0x4 - core index']
  #allocation1 [shape = 'u32[144,128]{1,0:T(1,128)}', space=vmem, size = 0x12000, scoped, tag = 'internal scratch']
  %s0 = inlined_call_operand.vmem [shape: bf16[2,16], index: 0, kind: input, shape index: {}]
  %s1 = inlined_call_operand.vmem [shape: bf16[16,64], index: 1, kind: input, shape index: {}]
  %s2 = inlined_call_operand.vmem [shape: f32[1,64], index: 2, kind: input, shape index: {}]
  %s3 = inlined_call_operand.vmem [shape: bf16[64,32], index: 3, kind: input, shape index: {}]
  %s4 = inlined_call_operand.vmem [shape: f32[1,32], index: 4, kind: input, shape index: {}]
  %s5 = inlined_call_operand.vmem [shape: bf16[32,4], index: 5, kind: input, shape index: {}]
  %s6 = inlined_call_operand.vmem [shape: f32[1,4], index: 6, kind: input, shape index: {}]
  %s7 = inlined_call_operand.hbm [shape: f32[2,4], index: 7, kind: output, shape index: {}]
  %s8 = sld [smem:[#allocation0]]
  $region38: #{simple_nn_regressor_forward.1} parent=0
    _
  %s10 = ssub.s32 1, %s8
  %s11 = scalar_select 0, %s10, %s8
  $region1: #{simple_nn_regressor_forward.1} parent=0
    #allocation2 [shape = 'u8[4096]{0}', space=vmem, size = 0x1000, scoped, tag = 'output window, operand 0, single buffered']
    #allocation3 [shape = 's32[1]{0}', space=sflag, size = 0x4, scoped, tag = 'scoped memory for simple_nn_regressor_forward.1']
    %12 = vsyncpa [#allocation3], 0
    // Predicated region
    $region2: #{simple_nn_regressor_forward.1} parent=1 // pred_check
      _
    $region3: #{simple_nn_regressor_forward.1} parent=1 // pred_check_branch
      %14 = sbr.rel (0) target = $region5
    $region4: #{simple_nn_regressor_forward.1} parent=1 // pred_region
      _
    $region5: #{simple_nn_regressor_forward.1} parent=1 // pred_fallthru
      _
    // Predicated region
    $region6: #{simple_nn_regressor_forward.1} parent=1 // pred_check
      _
    $region7: #{simple_nn_regressor_forward.1} parent=1 // pred_check_branch
      %16 = sbr.rel (0) target = $region9
    $region8: #{simple_nn_regressor_forward.1} parent=1 // pred_region
      _
    $region9: #{simple_nn_regressor_forward.1} parent=1 // pred_fallthru
      _
    // Predicated region
    $region10: #{simple_nn_regressor_forward.1} parent=1 // pred_check
      _
    $region11: #{simple_nn_regressor_forward.1} parent=1 // pred_check_branch
      %18 = sbr.rel (0) target = $region13
    $region12: #{simple_nn_regressor_forward.1} parent=1 // pred_region
      _
    $region13: #{simple_nn_regressor_forward.1} parent=1 // pred_fallthru
      _
    // Predicated region
    $region14: #{simple_nn_regressor_forward.1} parent=1 // pred_check
      _
    $region15: #{simple_nn_regressor_forward.1} parent=1 // pred_check_branch
      %20 = sbr.rel (0) target = $region17
    $region16: #{simple_nn_regressor_forward.1} parent=1 // pred_region
      _
    $region17: #{simple_nn_regressor_forward.1} parent=1 // pred_fallthru
      _
    // Predicated region
    $region18: #{simple_nn_regressor_forward.1} parent=1 // pred_check
      _
    $region19: #{simple_nn_regressor_forward.1} parent=1 // pred_check_branch
      %22 = sbr.rel (0) target = $region21
    $region20: #{simple_nn_regressor_forward.1} parent=1 // pred_region
      _
    $region21: #{simple_nn_regressor_forward.1} parent=1 // pred_fallthru
      _
    // Predicated region
    $region22: #{simple_nn_regressor_forward.1} parent=1 // pred_check
      _
    $region23: #{simple_nn_regressor_forward.1} parent=1 // pred_check_branch
      %24 = sbr.rel (0) target = $region25
    $region24: #{simple_nn_regressor_forward.1} parent=1 // pred_region
      _
    $region25: #{simple_nn_regressor_forward.1} parent=1 // pred_fallthru
      _
    // Predicated region
    $region26: #{simple_nn_regressor_forward.1} parent=1 // pred_check
      _
    $region27: #{simple_nn_regressor_forward.1} parent=1 // pred_check_branch
      %26 = sbr.rel (0) target = $region29
    $region28: #{simple_nn_regressor_forward.1} parent=1 // pred_region
      _
    $region29: #{simple_nn_regressor_forward.1} parent=1 // pred_fallthru
      _
    %v28 = vld [vmem:[%s0] sm:$0x1]
    %v29 = vld [vmem:[%s0 + $0x1] sm:$0x1]
    %v30 = vld [vmem:[%s0 + $0x2] sm:$0x1]
    %v31 = vld [vmem:[%s0 + $0x3] sm:$0x1]
    %v32 = vld [vmem:[%s1] sm:$0xf]
    %v33 = vld [vmem:[%s1 + $0x4] sm:$0xf]
    %v34 = vld [vmem:[%s2] sm:$0x1]
    %v36 = vlaneseq
    %v37 = vshrl.u32 %v36, 7
    %v38 = vsub.s32 0, %v37
    %v39 = vrot.slane %v34, %v38
    %v45 = vcombine.low %v28, %v29
    %v46 = vcombine.low %v30, %v31
    %v48 = vunpack.c.l.s4 1966171168
    %v49 = vunpack.c.0.s8 %v48
    %v50 = vlaneseq
    %v51 = vshrl.u32 %v50, 7
    %v52 = vsub.s32 %v49, %v51
    %v53 = vrot.slane %v45, %v52
    %v55 = vunpack.c.l.s4 1966171168
    %v56 = vunpack.c.0.s8 %v55
    %v57 = vlaneseq
    %v58 = vshrl.u32 %v57, 7
    %v59 = vsub.s32 %v56, %v58
    %v60 = vrot.slane %v46, %v59
    %v61 = vcombine.low %v53, %v60
    %v63 = vunpack.c.l.s4 1966171168
    %v64 = vunpack.c.0.s8 %v63
    %v65 = vlaneseq
    %v66 = vshrl.u32 %v65, 7
    %v67 = vsub.s32 %v64, %v66
    %v68 = vrot.slane %v61, %v67
    %v71 = vunpack.c.l.b16 %v32
    %v72 = vunpack.c.l.b16 %v33
    %v73 = vpack.c.b16 %v72, %v71
    %vm75 = vcmask 130048
    %v77 = vsel %vm75, %v68, 0
    %79 = vmatprep.subr.bf16.mxu0 0
    %80 = vmatpush1.bf16.msra.mxu0 %v73
    %81 = vmatprep.subr.bf16.mxu0 0
    %82 = vmatpush1.bf16.msra.mxu0 0
    %83 = vmatprep.subr.bf16.mxu0 0
    %84 = vmatpush1.bf16.msra.mxu0 0
    %85 = vmatprep.subr.bf16.mxu0 0
    %86 = vmatpush1.bf16.msra.mxu0 0
    %87 = vmatprep.subr.bf16.mxu0 0
    %88 = vmatpush1.bf16.msra.mxu0 0
    %89 = vmatprep.subr.bf16.mxu0 0
    %90 = vmatpush1.bf16.msra.mxu0 0
    %91 = vmatprep.subr.bf16.mxu0 0
    %92 = vmatpush1.bf16.msra.mxu0 0
    %93 = vmatprep.subr.bf16.mxu0 0
    %94 = vmatpush1.bf16.msra.mxu0 0
    %95 = vmatprep.subr.bf16.mxu0 0
    %96 = vmatpush1.bf16.msra.mxu0 0
    %97 = vmatprep.subr.bf16.mxu0 0
    %98 = vmatpush1.bf16.msra.mxu0 0
    %99 = vmatprep.subr.bf16.mxu0 0
    %100 = vmatpush1.bf16.msra.mxu0 0
    %101 = vmatprep.subr.bf16.mxu0 0
    %102 = vmatpush1.bf16.msra.mxu0 0
    %103 = vmatprep.subr.bf16.mxu0 0
    %104 = vmatpush1.bf16.msra.mxu0 0
    %105 = vmatprep.subr.bf16.mxu0 0
    %106 = vmatpush1.bf16.msra.mxu0 0
    %107 = vmatprep.subr.bf16.mxu0 0
    %108 = vmatpush1.bf16.msra.mxu0 0
    %109 = vmatprep.subr.bf16.mxu0 0
    %110 = vmatpush1.bf16.msra.mxu0 0
    %111 = vmatprep.mubr.bf16.mxu0 0
    %112 = vmatmul.mubr.bf16.gmra.mrb[0].mxu0 %v77
    %v113 = vpop.f32.mrb[0].mxu0
    %v114 = vadd.f32 %v39, %v113
    %v115 = vpop.f32.mrb[0].mxu0
    %v116 = vpop.f32.mrb[0].mxu0
    %v117 = vpop.f32.mrb[0].mxu0
    %118 = vdwg.mxu0
    %v119 = vmax.f32 %v114, 0.0
    %v120 = vpack.c.bf16 %v119, %v119
    %v121 = vld [vmem:[%s3] sm:$0xf]
    %v122 = vld [vmem:[%s3 + $0x4] sm:$0xf]
    %v123 = vld [vmem:[%s3 + $0x8] sm:$0xf]
    %v124 = vld [vmem:[%s3 + $0xc] sm:$0xf]
    %v125 = vld [vmem:[%s3 + $0x10] sm:$0xf]
    %v126 = vld [vmem:[%s3 + $0x14] sm:$0xf]
    %v127 = vld [vmem:[%s3 + $0x18] sm:$0xf]
    %v128 = vld [vmem:[%s3 + $0x1c] sm:$0xf]
    %v129 = vld [vmem:[%s4] sm:$0x1]
    %v131 = vlaneseq
    %v132 = vshrl.u32 %v131, 7
    %v133 = vsub.s32 0, %v132
    %v134 = vrot.slane %v129, %v133
    %v144 = vunpack.c.l.b16 %v121
    %v145 = vunpack.c.l.b16 %v122
    %v146 = vunpack.c.l.b16 %v123
    %v147 = vunpack.c.l.b16 %v124
    %v148 = vunpack.c.l.b16 %v125
    %v149 = vunpack.c.l.b16 %v126
    %v150 = vunpack.c.l.b16 %v127
    %v151 = vunpack.c.l.b16 %v128
    %v152 = vpack.c.b16 %v145, %v144
    %v153 = vpack.c.b16 %v147, %v146
    %v154 = vpack.c.b16 %v149, %v148
    %v155 = vpack.c.b16 %v151, %v150
    %vm160 = vcmask 523264
    %v162 = vsel %vm160, %v120, 0
    %164 = vmatprep.subr.bf16.mxu0 0
    %165 = vmatpush1.bf16.msra.mxu0 %v152
    %166 = vmatprep.subr.bf16.mxu0 0
    %167 = vmatpush1.bf16.msra.mxu0 %v153
    %168 = vmatprep.subr.bf16.mxu0 0
    %169 = vmatpush1.bf16.msra.mxu0 %v154
    %170 = vmatprep.subr.bf16.mxu0 0
    %171 = vmatpush1.bf16.msra.mxu0 %v155
    %172 = vmatprep.subr.bf16.mxu0 0
    %173 = vmatpush1.bf16.msra.mxu0 0
    %174 = vmatprep.subr.bf16.mxu0 0
    %175 = vmatpush1.bf16.msra.mxu0 0
    %176 = vmatprep.subr.bf16.mxu0 0
    %177 = vmatpush1.bf16.msra.mxu0 0
    %178 = vmatprep.subr.bf16.mxu0 0
    %179 = vmatpush1.bf16.msra.mxu0 0
    %180 = vmatprep.subr.bf16.mxu0 0
    %181 = vmatpush1.bf16.msra.mxu0 0
    %182 = vmatprep.subr.bf16.mxu0 0
    %183 = vmatpush1.bf16.msra.mxu0 0
    %184 = vmatprep.subr.bf16.mxu0 0
    %185 = vmatpush1.bf16.msra.mxu0 0
    %186 = vmatprep.subr.bf16.mxu0 0
    %187 = vmatpush1.bf16.msra.mxu0 0
    %188 = vmatprep.subr.bf16.mxu0 0
    %189 = vmatpush1.bf16.msra.mxu0 0
    %190 = vmatprep.subr.bf16.mxu0 0
    %191 = vmatpush1.bf16.msra.mxu0 0
    %192 = vmatprep.subr.bf16.mxu0 0
    %193 = vmatpush1.bf16.msra.mxu0 0
    %194 = vmatprep.subr.bf16.mxu0 0
    %195 = vmatpush1.bf16.msra.mxu0 0
    %196 = vmatprep.mubr.bf16.mxu0 0
    %197 = vmatmul.mubr.bf16.gmra.mrb[0].mxu0 %v162
    %v198 = vpop.f32.mrb[0].mxu0
    %v199 = vadd.f32 %v134, %v198
    %v200 = vpop.f32.mrb[0].mxu0
    %v201 = vpop.f32.mrb[0].mxu0
    %v202 = vpop.f32.mrb[0].mxu0
    %203 = vdwg.mxu0
    %v204 = vmax.f32 %v199, 0.0
    %v205 = vpack.c.bf16 %v204, %v204
    %v206 = vld [vmem:[%s5] sm:$0xf]
    %v207 = vld [vmem:[%s5 + $0x4] sm:$0xf]
    %v208 = vld [vmem:[%s5 + $0x8] sm:$0xf]
    %v209 = vld [vmem:[%s5 + $0xc] sm:$0xf]
    %v210 = vld [vmem:[%s6] sm:$0x1]
    %v212 = vlaneseq
    %v213 = vshrl.u32 %v212, 7
    %v214 = vsub.s32 0, %v213
    %v215 = vrot.slane %v210, %v214
    %v221 = vunpack.c.l.b16 %v206
    %v222 = vunpack.c.l.b16 %v207
    %v223 = vunpack.c.l.b16 %v208
    %v224 = vunpack.c.l.b16 %v209
    %v225 = vpack.c.b16 %v222, %v221
    %v226 = vpack.c.b16 %v224, %v223
    %vm229 = vcmask 261120
    %v231 = vsel %vm229, %v205, 0
    %233 = vmatprep.subr.bf16.mxu0 0
    %234 = vmatpush1.bf16.msra.mxu0 %v225
    %235 = vmatprep.subr.bf16.mxu0 0
    %236 = vmatpush1.bf16.msra.mxu0 %v226
    %237 = vmatprep.subr.bf16.mxu0 0
    %238 = vmatpush1.bf16.msra.mxu0 0
    %239 = vmatprep.subr.bf16.mxu0 0
    %240 = vmatpush1.bf16.msra.mxu0 0
    %241 = vmatprep.subr.bf16.mxu0 0
    %242 = vmatpush1.bf16.msra.mxu0 0
    %243 = vmatprep.subr.bf16.mxu0 0
    %244 = vmatpush1.bf16.msra.mxu0 0
    %245 = vmatprep.subr.bf16.mxu0 0
    %246 = vmatpush1.bf16.msra.mxu0 0
    %247 = vmatprep.subr.bf16.mxu0 0
    %248 = vmatpush1.bf16.msra.mxu0 0
    %249 = vmatprep.subr.bf16.mxu0 0
    %250 = vmatpush1.bf16.msra.mxu0 0
    %251 = vmatprep.subr.bf16.mxu0 0
    %252 = vmatpush1.bf16.msra.mxu0 0
    %253 = vmatprep.subr.bf16.mxu0 0
    %254 = vmatpush1.bf16.msra.mxu0 0
    %255 = vmatprep.subr.bf16.mxu0 0
    %256 = vmatpush1.bf16.msra.mxu0 0
    %257 = vmatprep.subr.bf16.mxu0 0
    %258 = vmatpush1.bf16.msra.mxu0 0
    %259 = vmatprep.subr.bf16.mxu0 0
    %260 = vmatpush1.bf16.msra.mxu0 0
    %261 = vmatprep.subr.bf16.mxu0 0
    %262 = vmatpush1.bf16.msra.mxu0 0
    %263 = vmatprep.subr.bf16.mxu0 0
    %264 = vmatpush1.bf16.msra.mxu0 0
    %265 = vmatprep.mubr.bf16.mxu0 0
    %266 = vmatmul.mubr.bf16.gmra.mrb[0].mxu0 %v231
    %v267 = vpop.f32.mrb[0].mxu0
    %v268 = vadd.f32 %v215, %v267
    %v269 = vpop.f32.mrb[0].mxu0
    %v270 = vpop.f32.mrb[0].mxu0
    %v271 = vpop.f32.mrb[0].mxu0
    %272 = vdwg.mxu0
    %vm273 = vcmask 31744
    %274 = vst.msk [vmem:[#allocation2] sm:$0xff] %vm273, %v268
    // Predicated region
    $region30: #{simple_nn_regressor_forward.1} parent=1 // pred_check
      _
    $region31: #{simple_nn_regressor_forward.1} parent=1 // pred_check_branch
      %276 = sbr.rel (0) target = $region33
    $region32: #{simple_nn_regressor_forward.1} parent=1 // pred_region
      %s278 = ssub.s32 128, 32
      %279 = vsyncadd [#allocation3], %s278
      %s280 = sshll.u32 [#allocation2], 4
      %s281 = int_to_ptr.vmem [resolvable:$true] %s280
      %286 = dma.vmem_to_hbm [thread:$0]  %s281, 32, %s7, [#allocation3], 32, 32, 2
    $region33: #{simple_nn_regressor_forward.1} parent=1 // pred_fallthru
      _
    // Predicated region
    $region34: #{simple_nn_regressor_forward.1} parent=1 // pred_check
      _
    $region35: #{simple_nn_regressor_forward.1} parent=1 // pred_check_branch
      %288 = sbr.rel (0) target = $region37
    $region36: #{simple_nn_regressor_forward.1} parent=1 // pred_region
      %289 = dma.done [#allocation3], 128
    $region37: #{simple_nn_regressor_forward.1} parent=1 // pred_fallthru
      _
    %290 = vsyncpa [#allocation3], 1

</llo_original>
